<compile_context>
chip_gen: v7x
topology: tpu7x:2x2x1
jax: 0.10.0
libtpu: 0.0.40
codegen_flags: <defaults>
</compile_context>

<pallas_src>
import functools

import jax
import jax.numpy as jnp
from jax.experimental import pallas as pl
from jax.experimental.pallas import tpu as pltpu


def _round_up(x, m):
    return ((x + m - 1) // m) * m


def _cdiv(a, b):
    return -(-a // b)


def ffn_kernel(x_ref, w1_ref, b1_ref, w2_ref, b2_ref, o_ref, *scratch, mxu_dtype):
    """One batch tile; grid axis 1 streams hidden chunks (reduction)."""
    acc_ref = scratch[0] if scratch else o_ref  # f32 output: accumulate in place
    k = pl.program_id(1)

    @pl.when(k == 0)
    def _init():
        acc_ref[...] = jnp.zeros_like(acc_ref)

    # Layer 1, this hidden chunk only (computed exactly once per (i, k)):
    #   h = relu(x @ W1[:, hk] + b1[hk])          (MXU + VPU, f32 accumulate)
    h = jnp.dot(x_ref[...].astype(mxu_dtype), w1_ref[...].astype(mxu_dtype),
                preferred_element_type=jnp.float32)
    h = jnp.maximum(h + b1_ref[...].astype(jnp.float32), 0.0)

    # Layer 2 partial: acc += h @ W2[hk, :]       (MXU, f32 accumulate)
    acc_ref[...] += jnp.dot(h.astype(mxu_dtype), w2_ref[...].astype(mxu_dtype),
                            preferred_element_type=jnp.float32)

    @pl.when(k == pl.num_programs(1) - 1)
    def _finalize():
        o_ref[...] = (acc_ref[...] + b2_ref[...].astype(jnp.float32)).astype(o_ref.dtype)


@functools.partial(jax.jit, static_argnames=("block_b", "block_h", "mxu_bf16"))
def feedforward(x, w1, b1, w2, b2, *, block_b=256, block_h=256, mxu_bf16=False):
    B, I = x.shape
    H = w1.shape[1]
    O = w2.shape[1]
    out_dtype = x.dtype

    in_bytes = jnp.dtype(x.dtype).itemsize
    out_bytes = jnp.dtype(out_dtype).itemsize
    sublane = 8 if in_bytes >= 4 else 16
    use_acc = jnp.dtype(out_dtype) != jnp.dtype(jnp.float32)
    mxu_dtype = jnp.bfloat16 if (mxu_bf16 or jnp.dtype(x.dtype) == jnp.dtype(jnp.bfloat16)) \
        else x.dtype

    # ---- lane/sublane-dense tile selection ---------------------------------
    Ip = _round_up(I, 128)
    Op = _round_up(O, 128)

    # Hidden chunk: multiple of 128 (>=256 fills the v6e/v7x 256-wide MXU).
    th = min(_round_up(block_h, 128), _round_up(H, 128))

    # Batch tile: split B near-evenly so the last tile is nearly full.
    n_bt = max(1, _cdiv(B, block_b))
    tb = _round_up(_cdiv(B, n_bt), sublane)
    # Megacore (v7x): guarantee >= 2 programs on the parallel batch axis.
    if _cdiv(B, tb) < 2 and B > sublane:
        tb = _round_up(_cdiv(B, 2), sublane)

    # ---- VMEM budgeting (fits v7x's 64 MiB physical VMEM with headroom) ----
    def footprint(tb_, th_):
        dbl_in = 2 * (tb_ * Ip + Ip * th_ + th_ + th_ * Op + Op) * in_bytes
        dbl_out = 2 * tb_ * Op * out_bytes
        acc = tb_ * Op * 4 if use_acc else 0
        return dbl_in + dbl_out + acc

    BUDGET = 40 * 1024 * 1024
    while footprint(tb, th) > BUDGET and th > 128:
        th = max(128, (th // 2 // 128) * 128)
    while footprint(tb, th) > BUDGET and tb > sublane:
        tb = max(sublane, _round_up(tb // 2, sublane))

    Bp = _round_up(B, tb)
    Hp = _round_up(H, th)          # pad hidden to a multiple of the chunk
    fp = footprint(tb, th)
    vmem_limit = int(min(max(int(fp * 1.5) + (8 << 20), 32 << 20), 100 << 20))

    # ---- padding (skipped entirely when dims are already aligned) ----------
    xp = x if (Bp == B and Ip == I) else jnp.pad(x, ((0, Bp - B), (0, Ip - I)))
    w1p = w1 if (Ip == I and Hp == H) else jnp.pad(w1, ((0, Ip - I), (0, Hp - H)))
    b1p = b1 if Hp == H else jnp.pad(b1, ((0, 0), (0, Hp - H)))
    w2p = w2 if (Hp == H and Op == O) else jnp.pad(w2, ((0, Hp - H), (0, Op - O)))
    b2p = b2 if Op == O else jnp.pad(b2, ((0, 0), (0, Op - O)))

    grid = (Bp // tb, Hp // th)

    cost = pl.CostEstimate(
        flops=2 * B * I * H + 2 * B * H * O,
        transcendentals=0,
        bytes_accessed=(B * I + I * H + H + H * O + O) * in_bytes + B * O * out_bytes,
    )

    kernel = functools.partial(ffn_kernel, mxu_dtype=mxu_dtype)
    scratch_shapes = [pltpu.VMEM((tb, Op), jnp.float32)] if use_acc else []

    out_p = pl.pallas_call(
        kernel,
        out_shape=jax.ShapeDtypeStruct((Bp, Op), out_dtype),
        grid_spec=pltpu.PrefetchScalarGridSpec(
            num_scalar_prefetch=0,
            grid=grid,
            in_specs=[
                pl.BlockSpec((tb, Ip), lambda i, k: (i, 0)),   # x batch tile
                pl.BlockSpec((Ip, th), lambda i, k: (0, k)),   # W1 hidden chunk
                pl.BlockSpec((1, th), lambda i, k: (0, k)),    # b1 chunk
                pl.BlockSpec((th, Op), lambda i, k: (k, 0)),   # W2 hidden chunk
                pl.BlockSpec((1, Op), lambda i, k: (0, 0)),    # b2 (loaded once)
            ],
            out_specs=pl.BlockSpec((tb, Op), lambda i, k: (i, 0)),
            scratch_shapes=scratch_shapes,
        ),
        compiler_params=pltpu.CompilerParams(
            dimension_semantics=("parallel", "arbitrary"),
            vmem_limit_bytes=vmem_limit,
        ),
        cost_estimate=cost,
    )(xp, w1p, b1p, w2p, b2p)

    return out_p[:B, :O]


def init_params(key, input_size, hidden_size, output_size, dtype=jnp.float32):
    # Mimics PyTorch nn.Linear default init: U(-1/sqrt(fan_in), 1/sqrt(fan_in)).
    k1, k2, k3, k4 = jax.random.split(key, 4)
    bound1 = 1.0 / (input_size ** 0.5)
    bound2 = 1.0 / (hidden_size ** 0.5)
    w1 = jax.random.uniform(k1, (input_size, hidden_size), dtype, -bound1, bound1)
    b1 = jax.random.uniform(k2, (1, hidden_size), dtype, -bound1, bound1)
    w2 = jax.random.uniform(k3, (hidden_size, output_size), dtype, -bound2, bound2)
    b2 = jax.random.uniform(k4, (1, output_size), dtype, -bound2, bound2)
    return w1, b1, w2, b2


def feedforward_ref(x, w1, b1, w2, b2):
    h = jnp.maximum(x @ w1 + b1, 0.0)
    return h @ w2 + b2


if __name__ == "__main__":
    key = jax.random.PRNGKey(0)
    k1, k2, k3, k4 = jax.random.split(key, 4)

    # --- Test 1: small, unaligned, f32 -------------------------------------
    # Exercises padding and the accumulate-directly-into-o_ref path; batch is
    # split into 2 tiles so the parallel axis has >= 2 programs.
    B, I, H, O = 16, 32, 64, 16
    x = jax.random.normal(k1, (B, I), jnp.float32)
    params = init_params(k2, I, H, O)
    out = jax.block_until_ready(feedforward(x, *params))
    ref = feedforward_ref(x, *params)
    assert out.shape == (B, O)
    assert jnp.allclose(out, ref, atol=1e-4, rtol=1e-4)

    # --- Test 2: 128-aligned dims, multi-tile grid, bf16 end-to-end --------
    # Exercises the f32 accumulator scratch path and the bf16 MXU path; no
    # weight padding is performed since every feature dim is already aligned.
    B2, I2, H2, O2 = 384, 256, 512, 384
    x2 = jax.random.normal(k3, (B2, I2), jnp.float32)
    p2 = init_params(k4, I2, H2, O2)
    x2b = x2.astype(jnp.bfloat16)
    p2b = tuple(p.astype(jnp.bfloat16) for p in p2)
    out2 = jax.block_until_ready(feedforward(x2b, *p2b, block_b=256, block_h=256))
    ref2 = feedforward_ref(x2b.astype(jnp.float32),
                           *[p.astype(jnp.float32) for p in p2b])
    assert out2.shape == (B2, O2)
    assert jnp.allclose(out2.astype(jnp.float32), ref2, atol=5e-2, rtol=5e-2)

    # --- Test 3: f32 inputs with the forced bf16-MXU path (v6e/v7x rec.) ---
    out3 = jax.block_until_ready(feedforward(x2, *p2, mxu_bf16=True))
    ref3 = feedforward_ref(x2, *p2)
    assert out3.shape == (B2, O2)
    assert jnp.allclose(out3, ref3, atol=5e-2, rtol=5e-2)

    print("KERNEL_OK")
</pallas_src>

<mosaic_0001>
module attributes {stable_mosaic.version = 11 : i64} {
  func.func @ffn_kernel(%arg0: i32, %arg1: i32, %arg2: memref<8x128xf32, #tpu.memory_space<vmem>>, %arg3: memref<128x128xf32, #tpu.memory_space<vmem>>, %arg4: memref<1x128xf32, #tpu.memory_space<vmem>>, %arg5: memref<128x128xf32, #tpu.memory_space<vmem>>, %arg6: memref<1x128xf32, #tpu.memory_space<vmem>>, %arg7: memref<8x128xf32, #tpu.memory_space<vmem>>) attributes {dimension_semantics = [#tpu.dimension_semantics<parallel>, #tpu.dimension_semantics<arbitrary>], iteration_bounds = array<i64: 2, 1>, scalar_prefetch = 0 : i64, scratch_operands = 0 : i64, tpu.core_type = #tpu.core_type<tc>, window_params = [{transform_indices = @transform_0, window_bounds = array<i64: 8, 128>}, {transform_indices = @transform_1, window_bounds = array<i64: 128, 128>}, {transform_indices = @transform_2, window_bounds = array<i64: 1, 128>}, {transform_indices = @transform_3, window_bounds = array<i64: 128, 128>}, {pipeline_mode = #tpu.pipeline_mode<synchronous>, transform_indices = @transform_4, window_bounds = array<i64: 1, 128>}, {transform_indices = @transform_5, window_bounds = array<i64: 8, 128>}]} {
    %c0_i32 = arith.constant 0 : i32
    %0 = arith.cmpi eq, %arg1, %c0_i32 : i32
    %1 = arith.extui %0 : i1 to i32
    %c0_i32_0 = arith.constant 0 : i32
    %2 = arith.cmpi ne, %1, %c0_i32_0 : i32
    scf.if %2 {
      %cst_16 = arith.constant 0.000000e+00 : f32
      %19 = vector.broadcast %cst_16 : f32 to vector<8x128xf32>
      %c0_17 = arith.constant 0 : index
      %c0_18 = arith.constant 0 : index
      %20 = vector.load %arg7[%c0_17, %c0_18] : memref<8x128xf32, #tpu.memory_space<vmem>>, vector<8x128xf32>
      tpu.vector_store %arg7[%c0_17, %c0_18], %19 {strides = array<i32>} : memref<8x128xf32, #tpu.memory_space<vmem>>, vector<8x128xf32>,
    } else {
    }
    %c0 = arith.constant 0 : index
    %c0_1 = arith.constant 0 : index
    %3 = vector.load %arg2[%c0, %c0_1] : memref<8x128xf32, #tpu.memory_space<vmem>>, vector<8x128xf32>
    %c0_2 = arith.constant 0 : index
    %c0_3 = arith.constant 0 : index
    %4 = vector.load %arg3[%c0_2, %c0_3] : memref<128x128xf32, #tpu.memory_space<vmem>>, vector<128x128xf32>
    %cst = arith.constant dense<0.000000e+00> : vector<8x128xf32>
    %5 = tpu.matmul %3, %4, %cst {dimension_numbers = #tpu.dot_dimension_numbers<[1], [0], [0], [1], [0, 0, 1, 1], [], []>} : vector<8x128xf32>, vector<128x128xf32>, vector<8x128xf32> -> vector<8x128xf32>
    %c0_4 = arith.constant 0 : index
    %c0_5 = arith.constant 0 : index
    %6 = vector.load %arg4[%c0_4, %c0_5] : memref<1x128xf32, #tpu.memory_space<vmem>>, vector<1x128xf32>
    %7 = vector.broadcast %6 : vector<1x128xf32> to vector<8x128xf32>
    %8 = arith.addf %5, %7 : vector<8x128xf32>
    %cst_6 = arith.constant 0.000000e+00 : f32
    %9 = vector.broadcast %cst_6 : f32 to vector<8x128xf32>
    %10 = arith.maximumf %8, %9 : vector<8x128xf32>
    %c0_7 = arith.constant 0 : index
    %c0_8 = arith.constant 0 : index
    %11 = vector.load %arg7[%c0_7, %c0_8] : memref<8x128xf32, #tpu.memory_space<vmem>>, vector<8x128xf32>
    %c0_9 = arith.constant 0 : index
    %c0_10 = arith.constant 0 : index
    %12 = vector.load %arg5[%c0_9, %c0_10] : memref<128x128xf32, #tpu.memory_space<vmem>>, vector<128x128xf32>
    %cst_11 = arith.constant dense<0.000000e+00> : vector<8x128xf32>
    %13 = tpu.matmul %10, %12, %cst_11 {dimension_numbers = #tpu.dot_dimension_numbers<[1], [0], [0], [1], [0, 0, 1, 1], [], []>} : vector<8x128xf32>, vector<128x128xf32>, vector<8x128xf32> -> vector<8x128xf32>
    %14 = arith.addf %11, %13 : vector<8x128xf32>
    %c0_12 = arith.constant 0 : index
    %c0_13 = arith.constant 0 : index
    %15 = vector.load %arg7[%c0_12, %c0_13] : memref<8x128xf32, #tpu.memory_space<vmem>>, vector<8x128xf32>
    tpu.vector_store %arg7[%c0_12, %c0_13], %14 {strides = array<i32>} : memref<8x128xf32, #tpu.memory_space<vmem>>, vector<8x128xf32>,
    %c0_i32_14 = arith.constant 0 : i32
    %16 = arith.cmpi eq, %arg1, %c0_i32_14 : i32
    %17 = arith.extui %16 : i1 to i32
    %c0_i32_15 = arith.constant 0 : i32
    %18 = arith.cmpi ne, %17, %c0_i32_15 : i32
    scf.if %18 {
      %c0_16 = arith.constant 0 : index
      %c0_17 = arith.constant 0 : index
      %19 = vector.load %arg7[%c0_16, %c0_17] : memref<8x128xf32, #tpu.memory_space<vmem>>, vector<8x128xf32>
      %c0_18 = arith.constant 0 : index
      %c0_19 = arith.constant 0 : index
      %20 = vector.load %arg6[%c0_18, %c0_19] : memref<1x128xf32, #tpu.memory_space<vmem>>, vector<1x128xf32>
      %21 = vector.broadcast %20 : vector<1x128xf32> to vector<8x128xf32>
      %22 = arith.addf %19, %21 : vector<8x128xf32>
      %c0_20 = arith.constant 0 : index
      %c0_21 = arith.constant 0 : index
      %23 = vector.load %arg7[%c0_20, %c0_21] : memref<8x128xf32, #tpu.memory_space<vmem>>, vector<8x128xf32>
      tpu.vector_store %arg7[%c0_20, %c0_21], %22 {strides = array<i32>} : memref<8x128xf32, #tpu.memory_space<vmem>>, vector<8x128xf32>,
    } else {
    }
    return
  }
  func.func @transform_0(%arg0: i32, %arg1: i32) -> (i32, i32) {
    %c0_i32 = arith.constant 0 : i32
    %c0_i32_0 = arith.constant 0 : i32
    return %arg0, %c0_i32 : i32, i32
  }
  func.func @transform_1(%arg0: i32, %arg1: i32) -> (i32, i32) {
    %c0_i32 = arith.constant 0 : i32
    %c0_i32_0 = arith.constant 0 : i32
    return %c0_i32, %arg1 : i32, i32
  }
  func.func @transform_2(%arg0: i32, %arg1: i32) -> (i32, i32) {
    %c0_i32 = arith.constant 0 : i32
    %c0_i32_0 = arith.constant 0 : i32
    return %c0_i32, %arg1 : i32, i32
  }
  func.func @transform_3(%arg0: i32, %arg1: i32) -> (i32, i32) {
    %c0_i32 = arith.constant 0 : i32
    %c0_i32_0 = arith.constant 0 : i32
    return %arg1, %c0_i32 : i32, i32
  }
  func.func @transform_4(%arg0: i32, %arg1: i32) -> (i32, i32) {
    %c0_i32 = arith.constant 0 : i32
    %c0_i32_0 = arith.constant 0 : i32
    %c0_i32_1 = arith.constant 0 : i32
    return %c0_i32, %c0_i32_0 : i32, i32
  }
  func.func @transform_5(%arg0: i32, %arg1: i32) -> (i32, i32) {
    %c0_i32 = arith.constant 0 : i32
    %c0_i32_0 = arith.constant 0 : i32
    return %arg0, %c0_i32 : i32, i32
  }
}

</mosaic_0001>

<llo_original>
// kernel: feedforward.1
$region0: #{feedforward.1}
  #allocation0 [shape = 'u32[]', space=smem, size = 0x4, offset = 0x4, fixed_abs, tag = 'smem constant byte address 0x4 - core index']
  #allocation1 [shape = 'u32[144,128]{1,0:T(1,128)}', space=vmem, size = 0x12000, scoped, tag = 'internal scratch']
  %s0 = inlined_call_operand.vmem [shape: f32[16,128], index: 0, kind: input, shape index: {}]
  %s1 = inlined_call_operand.vmem [shape: f32[128,128], index: 1, kind: input, shape index: {}]
  %s2 = inlined_call_operand.vmem [shape: f32[1,128], index: 2, kind: input, shape index: {}]
  %s3 = inlined_call_operand.vmem [shape: f32[128,128], index: 3, kind: input, shape index: {}]
  %s4 = inlined_call_operand.vmem [shape: f32[1,128], index: 4, kind: input, shape index: {}]
  %s5 = inlined_call_operand.hbm [shape: f32[16,128], index: 5, kind: output, shape index: {}]
  %s6 = sld [smem:[#allocation0]]
  $region61: #{feedforward.1} parent=0
    _
  %s8 = ssub.s32 1, %s6
  %s9 = scalar_select 0, %s8, %s6
  $region1: #{feedforward.1} parent=0
    #allocation2 [shape = 'u8[8192]{0}', space=vmem, size = 0x2000, scoped, tag = 'output window, operand 0']
    #allocation3 [shape = 's32[2]{0}', space=sflag, size = 0x8, scoped, tag = 'scoped memory for feedforward.1']
    %10 = vsyncpa [#allocation3], 0
    %s11 = scalar_lea.sflag [#allocation3], 1
    %12 = vsyncpa %s11, 0
    loop: start=0, step=1, limit=4
    $region2: #{feedforward.1} parent=1 // loop_pre_header
      _
    $region3: #{feedforward.1} parent=1 // loop_header
      %s14 = sphi 0, %s18
      %p15 = scmp.ge.s32.totalorder %s14, 4
      %s21 = sphi 0, %s33
      %s22 = sphi 0, %s29
      %s23 = sphi 0, %s21
      %s24 = sphi 0, %s22
      %s25 = sphi 0, %s23
      %s26 = sphi 0, %s24
      %s36 = sphi 0, %s38
      %s39 = sphi 0, %s36
      %s40 = sphi 0, %s39
      %s56 = sphi 0, %s40
      %s62 = sphi 0, %s64
      %s65 = sphi 0, %s62
      %s66 = sphi 0, %s65
      %s82 = sphi 0, %s66
      %s88 = sphi 0, %s90
      %s91 = sphi 0, %s88
      %s92 = sphi 0, %s91
      %s108 = sphi 0, %s92
      %s114 = sphi 0, %s116
      %s117 = sphi 0, %s114
      %s118 = sphi 0, %s117
      %s134 = sphi 0, %s118
      %s138 = sphi 0, %s138
      %s140 = sphi 0, %s138
      %s141 = sphi 0, %s140
      %s155 = sphi 0, %s141
      %s161 = sphi 0, %s163
      %s164 = sphi 0, %s161
      %s165 = sphi 0, %s164
      %s181 = sphi 0, %s165
    $region4: #{feedforward.1} parent=1 // loop_header_branch
      %17 = sbr.rel (%p15) target = $region8
    $region5: #{feedforward.1} parent=1 // loop_body
      %s19 = ssub.s32 %s14, 1
      %s20 = ssub.s32 %s14, 2
      %s27 = sadd.s32 1, %s22
      %p28 = scmp.ge.s32.totalorder %s27, 1
      %s29 = scalar_select %p28, 0, %s27
      %s30 = sadd.s32 1, %s21
      %s31 = scalar_select %p28, %s30, %s21
      %p32 = scmp.ge.s32.totalorder %s31, 2
      %s33 = scalar_select %p32, 0, %s31
      %s34 = ssub.s32 %s21, %s33
      %p35 = scmp.eq.s32.totalorder %s34, 0
      %s37 = sadd.s32 %s36, 1
      %s38 = scalar_select %p35, %s36, %s37
      %p41 = pneg %p35
      %p42 = scmp.eq.s32.totalorder %s14, 1
      %p43 = por %p41, %p42
      %p44 = scmp.ne.s32.totalorder %s36, %s39
      %p45 = scmp.eq.s32.totalorder %s14, 0
      %p46 = por %p44, %p45
      %p47 = scmp.ne.s32.totalorder %s36, %s39
      %p48 = scmp.eq.s32.totalorder %s19, 1
      %p49 = por %p47, %p48
      %p50 = scmp.ne.s32.totalorder %s39, %s40
      %p51 = scmp.eq.s32.totalorder %s19, 0
      %p52 = por %p50, %p51
      %p53 = scmp.ne.s32.totalorder %s39, %s40
      %p54 = scmp.eq.s32.totalorder %s20, 1
      %p55 = por %p53, %p54
      %p57 = scmp.ne.s32.totalorder %s40, %s56
      %p58 = scmp.eq.s32.totalorder %s20, 0
      %p59 = por %p57, %p58
      %s60 = ssub.s32 %s22, %s29
      %p61 = scmp.eq.s32.totalorder %s60, 0
      %s63 = sadd.s32 %s62, 1
      %s64 = scalar_select %p61, %s62, %s63
      %p67 = pneg %p61
      %p68 = scmp.eq.s32.totalorder %s14, 1
      %p69 = por %p67, %p68
      %p70 = scmp.ne.s32.totalorder %s62, %s65
      %p71 = scmp.eq.s32.totalorder %s14, 0
      %p72 = por %p70, %p71
      %p73 = scmp.ne.s32.totalorder %s62, %s65
      %p74 = scmp.eq.s32.totalorder %s19, 1
      %p75 = por %p73, %p74
      %p76 = scmp.ne.s32.totalorder %s65, %s66
      %p77 = scmp.eq.s32.totalorder %s19, 0
      %p78 = por %p76, %p77
      %p79 = scmp.ne.s32.totalorder %s65, %s66
      %p80 = scmp.eq.s32.totalorder %s20, 1
      %p81 = por %p79, %p80
      %p83 = scmp.ne.s32.totalorder %s66, %s82
      %p84 = scmp.eq.s32.totalorder %s20, 0
      %p85 = por %p83, %p84
      %s86 = ssub.s32 %s22, %s29
      %p87 = scmp.eq.s32.totalorder %s86, 0
      %s89 = sadd.s32 %s88, 1
      %s90 = scalar_select %p87, %s88, %s89
      %p93 = pneg %p87
      %p94 = scmp.eq.s32.totalorder %s14, 1
      %p95 = por %p93, %p94
      %p96 = scmp.ne.s32.totalorder %s88, %s91
      %p97 = scmp.eq.s32.totalorder %s14, 0
      %p98 = por %p96, %p97
      %p99 = scmp.ne.s32.totalorder %s88, %s91
      %p100 = scmp.eq.s32.totalorder %s19, 1
      %p101 = por %p99, %p100
      %p102 = scmp.ne.s32.totalorder %s91, %s92
      %p103 = scmp.eq.s32.totalorder %s19, 0
      %p104 = por %p102, %p103
      %p105 = scmp.ne.s32.totalorder %s91, %s92
      %p106 = scmp.eq.s32.totalorder %s20, 1
      %p107 = por %p105, %p106
      %p109 = scmp.ne.s32.totalorder %s92, %s108
      %p110 = scmp.eq.s32.totalorder %s20, 0
      %p111 = por %p109, %p110
      %s112 = ssub.s32 %s22, %s29
      %p113 = scmp.eq.s32.totalorder %s112, 0
      %s115 = sadd.s32 %s114, 1
      %s116 = scalar_select %p113, %s114, %s115
      %p119 = pneg %p113
      %p120 = scmp.eq.s32.totalorder %s14, 1
      %p121 = por %p119, %p120
      %p122 = scmp.ne.s32.totalorder %s114, %s117
      %p123 = scmp.eq.s32.totalorder %s14, 0
      %p124 = por %p122, %p123
      %p125 = scmp.ne.s32.totalorder %s114, %s117
      %p126 = scmp.eq.s32.totalorder %s19, 1
      %p127 = por %p125, %p126
      %p128 = scmp.ne.s32.totalorder %s117, %s118
      %p129 = scmp.eq.s32.totalorder %s19, 0
      %p130 = por %p128, %p129
      %p131 = scmp.ne.s32.totalorder %s117, %s118
      %p132 = scmp.eq.s32.totalorder %s20, 1
      %p133 = por %p131, %p132
      %p135 = scmp.ne.s32.totalorder %s118, %s134
      %p136 = scmp.eq.s32.totalorder %s20, 0
      %p137 = por %p135, %p136
      %s139 = sadd.s32 %s138, 1
      %p142 = scmp.eq.s32.totalorder %s14, 1
      %p143 = scmp.ne.s32.totalorder %s138, %s140
      %p144 = scmp.eq.s32.totalorder %s14, 0
      %p145 = por %p143, %p144
      %p146 = scmp.ne.s32.totalorder %s138, %s140
      %p147 = scmp.eq.s32.totalorder %s19, 1
      %p148 = por %p146, %p147
      %p149 = scmp.ne.s32.totalorder %s140, %s141
      %p150 = scmp.eq.s32.totalorder %s19, 0
      %p151 = por %p149, %p150
      %p152 = scmp.ne.s32.totalorder %s140, %s141
      %p153 = scmp.eq.s32.totalorder %s20, 1
      %p154 = por %p152, %p153
      %p156 = scmp.ne.s32.totalorder %s141, %s155
      %p157 = scmp.eq.s32.totalorder %s20, 0
      %p158 = por %p156, %p157
      %s159 = ssub.s32 %s21, %s33
      %p160 = scmp.eq.s32.totalorder %s159, 0
      %s162 = sadd.s32 %s161, 1
      %s163 = scalar_select %p160, %s161, %s162
      %p166 = pneg %p160
      %p167 = scmp.eq.s32.totalorder %s14, 1
      %p168 = por %p166, %p167
      %p169 = scmp.ne.s32.totalorder %s161, %s164
      %p170 = scmp.eq.s32.totalorder %s14, 0
      %p171 = por %p169, %p170
      %p172 = scmp.ne.s32.totalorder %s161, %s164
      %p173 = scmp.eq.s32.totalorder %s19, 1
      %p174 = por %p172, %p173
      %p175 = scmp.ne.s32.totalorder %s164, %s165
      %p176 = scmp.eq.s32.totalorder %s19, 0
      %p177 = por %p175, %p176
      %p178 = scmp.ne.s32.totalorder %s164, %s165
      %p179 = scmp.eq.s32.totalorder %s20, 1
      %p180 = por %p178, %p179
      %p182 = scmp.ne.s32.totalorder %s165, %s181
      %p183 = scmp.eq.s32.totalorder %s20, 0
      %p184 = por %p182, %p183
      %p185 = scmp.le.s32.totalorder 1, %s14
      %p186 = scmp.lt.s32.totalorder %s14, 3
      %p187 = pnand %p185, %p186
      %p188 = pneg %p187
      // Predicated region
      $region9: #{feedforward.1} parent=5 // pred_check
        _
      $region10: #{feedforward.1} parent=5 // pred_check_branch
        %190 = sbr.rel (%p187) target = $region12
      $region11: #{feedforward.1} parent=5 // pred_region
        %s191 = ssub.s32 %s14, 1
        // Predicated region
        $region13: #{feedforward.1} parent=11 // pred_check
          %p192 = pneg %p78
        $region14: #{feedforward.1} parent=11 // pred_check_branch
          %194 = sbr.rel (%p192) target = $region16
        $region15: #{feedforward.1} parent=11 // pred_region
          %p195 = scmp.lt.s32.totalorder %s24, 0
          %s196 = scalar_select %p195, %s24, 0
          %s197 = smul.addr %s196, 8
          %s198 = scalar_lea.vmem %s1, %s197
        $region16: #{feedforward.1} parent=11 // pred_fallthru
          _
        // Predicated region
        $region17: #{feedforward.1} parent=11 // pred_check
          %p199 = pneg %p104
        $region18: #{feedforward.1} parent=11 // pred_check_branch
          %201 = sbr.rel (%p199) target = $region20
        $region19: #{feedforward.1} parent=11 // pred_region
          %p202 = scmp.lt.s32.totalorder %s24, 0
          %s203 = scalar_select %p202, %s24, 0
          %s204 = scalar_lea.vmem %s2, %s203
        $region20: #{feedforward.1} parent=11 // pred_fallthru
          _
        // Predicated region
        $region21: #{feedforward.1} parent=11 // pred_check
          %p205 = pneg %p130
        $region22: #{feedforward.1} parent=11 // pred_check_branch
          %207 = sbr.rel (%p205) target = $region24
        $region23: #{feedforward.1} parent=11 // pred_region
          %s208 = smul.u32 16, %s24
          %p209 = scmp.lt.s32.totalorder %s208, 15
          %s210 = scalar_select %p209, %s208, 15
          %s211 = smul.addr %s210, 8
          %s212 = scalar_lea.vmem %s3, %s211
          %s213 = smul.u32 16, %s24
        $region24: #{feedforward.1} parent=11 // pred_fallthru
          _
        // Predicated region
        $region25: #{feedforward.1} parent=11 // pred_check
          %p214 = pneg %p151
        $region26: #{feedforward.1} parent=11 // pred_check_branch
          %216 = sbr.rel (%p214) target = $region28
        $region27: #{feedforward.1} parent=11 // pred_region
          _
        $region28: #{feedforward.1} parent=11 // pred_fallthru
          _
      $region12: #{feedforward.1} parent=5 // pred_fallthru
        _
      %p217 = scmp.lt.s32.totalorder %s14, 2
      // Predicated region
      $region29: #{feedforward.1} parent=5 // pred_check
        %p218 = pneg %p217
      $region30: #{feedforward.1} parent=5 // pred_check_branch
        %220 = sbr.rel (%p218) target = $region32
      $region31: #{feedforward.1} parent=5 // pred_region
        // Predicated region
        $region33: #{feedforward.1} parent=31 // pred_check
          %p221 = pneg %p46
        $region34: #{feedforward.1} parent=31 // pred_check_branch
          %223 = sbr.rel (%p221) target = $region36
        $region35: #{feedforward.1} parent=31 // pred_region
          %p224 = scmp.lt.s32.totalorder %s21, 1
          %s225 = scalar_select %p224, %s21, 1
          %s226 = smul.addr %s225, 8
          %s227 = scalar_lea.vmem %s0, %s226
        $region36: #{feedforward.1} parent=31 // pred_fallthru
          _
      $region32: #{feedforward.1} parent=5 // pred_fallthru
        _
      %p228 = scmp.le.s32.totalorder 1, %s14
      %p229 = scmp.lt.s32.totalorder %s14, 3
      %p230 = pnand %p228, %p229
      %p231 = pneg %p230
      // Predicated region
      $region37: #{feedforward.1} parent=5 // pred_check
        _
      $region38: #{feedforward.1} parent=5 // pred_check_branch
        %233 = sbr.rel (%p230) target = $region40
      $region39: #{feedforward.1} parent=5 // pred_region
        %s234 = ssub.s32 %s14, 1
        %p235 = scmp.lt.s32.totalorder %s23, 1
        %s236 = scalar_select %p235, %s23, 1
        %s237 = smul.addr %s236, 8
        %s238 = scalar_lea.vmem %s0, %s237
        %p239 = pneg %p52
        %p240 = pneg %p49
        %p241 = scmp.lt.s32.totalorder %s24, 0
        %s242 = scalar_select %p241, %s24, 0
        %s243 = smul.addr %s242, 8
        %s244 = scalar_lea.vmem %s1, %s243
        %p245 = pneg %p78
        %p246 = pneg %p75
        %p247 = scmp.lt.s32.totalorder %s24, 0
        %s248 = scalar_select %p247, %s24, 0
        %s249 = scalar_lea.vmem %s2, %s248
        %p250 = pneg %p104
        %p251 = pneg %p101
        %s252 = smul.u32 16, %s24
        %p253 = scmp.lt.s32.totalorder %s252, 15
        %s254 = scalar_select %p253, %s252, 15
        %s255 = smul.addr %s254, 8
        %s256 = scalar_lea.vmem %s3, %s255
        %p257 = pneg %p130
        %p258 = pneg %p127
        %p259 = pneg %p151
        %p260 = pneg %p148
        %p261 = pneg %p177
        %p262 = pneg %p174
        %s263 = sand.u32 %s164, 1
        %s264 = scalar_lea.sflag [#allocation3], %s263
        %s265 = sand.u32 %s164, 1
        %s266 = smul.addr %s265, 8
        %s267 = scalar_lea.vmem [#allocation2], %s266
        %p268 = scmp.lt.s32.totalorder %s23, 1
        %s269 = scalar_select %p268, %s23, 1
        %s270 = smul.addr %s269, 8
        %s271 = scalar_lea.vmem %s0, %s270
        %p272 = scmp.lt.s32.totalorder %s24, 0
        %s273 = scalar_select %p272, %s24, 0
        %s274 = smul.addr %s273, 8
        %s275 = scalar_lea.vmem %s1, %s274
        %p276 = scmp.lt.s32.totalorder %s24, 0
        %s277 = scalar_select %p276, %s24, 0
        %s278 = scalar_lea.vmem %s2, %s277
        %s279 = smul.u32 16, %s24
        %p280 = scmp.lt.s32.totalorder %s279, 15
        %s281 = scalar_select %p280, %s279, 15
        %s282 = smul.addr %s281, 8
        %s283 = scalar_lea.vmem %s3, %s282
        %s284 = smul.u32 16, %s24
        %p285 = scmp.eq.s32.totalorder %s24, 0
        // Predicated region
        $region41: #{feedforward.1} parent=39 // pred_check
          %p286 = pneg %p285
        $region42: #{feedforward.1} parent=39 // pred_check_branch
          %288 = sbr.rel (%p286) target = $region44
        $region43: #{feedforward.1} parent=39 // pred_region
          %289 = vst [vmem:[%s267] sm:$0xff] 0.0
        $region44: #{feedforward.1} parent=39 // pred_fallthru
          _
        %v290 = vld [vmem:[%s271] sm:$0xff]
        %v291 = vld [vmem:[%s275] sm:$0xff]
        %v292 = vld [vmem:[%s275 + $0x8] sm:$0xff]
        %v293 = vld [vmem:[%s275 + $0x10] sm:$0xff]
        %v294 = vld [vmem:[%s275 + $0x18] sm:$0xff]
        %v295 = vld [vmem:[%s275 + $0x20] sm:$0xff]
        %v296 = vld [vmem:[%s275 + $0x28] sm:$0xff]
        %v297 = vld [vmem:[%s275 + $0x30] sm:$0xff]
        %v298 = vld [vmem:[%s275 + $0x38] sm:$0xff]
        %v299 = vld [vmem:[%s275 + $0x40] sm:$0xff]
        %v300 = vld [vmem:[%s275 + $0x48] sm:$0xff]
        %v301 = vld [vmem:[%s275 + $0x50] sm:$0xff]
        %v302 = vld [vmem:[%s275 + $0x58] sm:$0xff]
        %v303 = vld [vmem:[%s275 + $0x60] sm:$0xff]
        %v304 = vld [vmem:[%s275 + $0x68] sm:$0xff]
        %v305 = vld [vmem:[%s275 + $0x70] sm:$0xff]
        %v306 = vld [vmem:[%s275 + $0x78] sm:$0xff]
        %v307 = vld [vmem:[%s278] sm:$0x1]
        %v309 = vlaneseq
        %v310 = vshrl.u32 %v309, 7
        %v311 = vsub.s32 0, %v310
        %v312 = vrot.slane %v307, %v311
        %314 = vmatprep.subr.mxu0 0.0
        %315 = vmatpush1.msra.mxu0 %v291
        %316 = vmatprep.subr.mxu0 0.0
        %317 = vmatpush1.msra.mxu0 %v292
        %318 = vmatprep.subr.mxu0 0.0
        %319 = vmatpush1.msra.mxu0 %v293
        %320 = vmatprep.subr.mxu0 0.0
        %321 = vmatpush1.msra.mxu0 %v294
        %322 = vmatprep.subr.mxu0 0.0
        %323 = vmatpush1.msra.mxu0 %v295
        %324 = vmatprep.subr.mxu0 0.0
        %325 = vmatpush1.msra.mxu0 %v296
        %326 = vmatprep.subr.mxu0 0.0
        %327 = vmatpush1.msra.mxu0 %v297
        %328 = vmatprep.subr.mxu0 0.0
        %329 = vmatpush1.msra.mxu0 %v298
        %330 = vmatprep.subr.mxu0 0.0
        %331 = vmatpush1.msra.mxu0 %v299
        %332 = vmatprep.subr.mxu0 0.0
        %333 = vmatpush1.msra.mxu0 %v300
        %334 = vmatprep.subr.mxu0 0.0
        %335 = vmatpush1.msra.mxu0 %v301
        %336 = vmatprep.subr.mxu0 0.0
        %337 = vmatpush1.msra.mxu0 %v302
        %338 = vmatprep.subr.mxu0 0.0
        %339 = vmatpush1.msra.mxu0 %v303
        %340 = vmatprep.subr.mxu0 0.0
        %341 = vmatpush1.msra.mxu0 %v304
        %342 = vmatprep.subr.mxu0 0.0
        %343 = vmatpush1.msra.mxu0 %v305
        %344 = vmatprep.subr.mxu0 0.0
        %345 = vmatpush1.msra.mxu0 %v306
        %346 = vmatprep.subr.mxu0 0.0
        %347 = vmatpush1.msra.mxu0 0.0
        %348 = vmatprep.subr.mxu0 0.0
        %349 = vmatpush1.msra.mxu0 0.0
        %350 = vmatprep.subr.mxu0 0.0
        %351 = vmatpush1.msra.mxu0 0.0
        %352 = vmatprep.subr.mxu0 0.0
        %353 = vmatpush1.msra.mxu0 0.0
        %354 = vmatprep.subr.mxu0 0.0
        %355 = vmatpush1.msra.mxu0 0.0
        %356 = vmatprep.subr.mxu0 0.0
        %357 = vmatpush1.msra.mxu0 0.0
        %358 = vmatprep.subr.mxu0 0.0
        %359 = vmatpush1.msra.mxu0 0.0
        %360 = vmatprep.subr.mxu0 0.0
        %361 = vmatpush1.msra.mxu0 0.0
        %362 = vmatprep.subr.mxu0 0.0
        %363 = vmatpush1.msra.mxu0 0.0
        %364 = vmatprep.subr.mxu0 0.0
        %365 = vmatpush1.msra.mxu0 0.0
        %366 = vmatprep.subr.mxu0 0.0
        %367 = vmatpush1.msra.mxu0 0.0
        %368 = vmatprep.subr.mxu0 0.0
        %369 = vmatpush1.msra.mxu0 0.0
        %370 = vmatprep.subr.mxu0 0.0
        %371 = vmatpush1.msra.mxu0 0.0
        %372 = vmatprep.subr.mxu0 0.0
        %373 = vmatpush1.msra.mxu0 0.0
        %374 = vmatprep.subr.mxu0 0.0
        %375 = vmatpush1.msra.mxu0 0.0
        %376 = vmatprep.subr.mxu0 0.0
        %377 = vmatpush1.msra.mxu0 0.0
        %378 = vmatprep.mubr.f32.mxu0 0.0
        %379 = vmatmul.mubr.f32.gmra.mrb[0].mxu0 %v290
        %v380 = vpop.f32.mrb[0].mxu0
        %v381 = vadd.f32 %v312, %v380
        %v382 = vpop.f32.mrb[0].mxu0
        %383 = vdwg.mxu0
        %v384 = vmax.f32 %v381, 0.0
        %v385 = vld [vmem:[%s267] sm:$0xff]
        %v386 = vld [vmem:[%s283] sm:$0xff]
        %v387 = vld [vmem:[%s283 + $0x8] sm:$0xff]
        %v388 = vld [vmem:[%s283 + $0x10] sm:$0xff]
        %v389 = vld [vmem:[%s283 + $0x18] sm:$0xff]
        %v390 = vld [vmem:[%s283 + $0x20] sm:$0xff]
        %v391 = vld [vmem:[%s283 + $0x28] sm:$0xff]
        %v392 = vld [vmem:[%s283 + $0x30] sm:$0xff]
        %v393 = vld [vmem:[%s283 + $0x38] sm:$0xff]
        %v394 = vld [vmem:[%s283 + $0x40] sm:$0xff]
        %v395 = vld [vmem:[%s283 + $0x48] sm:$0xff]
        %v396 = vld [vmem:[%s283 + $0x50] sm:$0xff]
        %v397 = vld [vmem:[%s283 + $0x58] sm:$0xff]
        %v398 = vld [vmem:[%s283 + $0x60] sm:$0xff]
        %v399 = vld [vmem:[%s283 + $0x68] sm:$0xff]
        %v400 = vld [vmem:[%s283 + $0x70] sm:$0xff]
        %v401 = vld [vmem:[%s283 + $0x78] sm:$0xff]
        %402 = vmatprep.subr.mxu0 0.0
        %403 = vmatpush1.msra.mxu0 %v386
        %404 = vmatprep.subr.mxu0 0.0
        %405 = vmatpush1.msra.mxu0 %v387
        %406 = vmatprep.subr.mxu0 0.0
        %407 = vmatpush1.msra.mxu0 %v388
        %408 = vmatprep.subr.mxu0 0.0
        %409 = vmatpush1.msra.mxu0 %v389
        %410 = vmatprep.subr.mxu0 0.0
        %411 = vmatpush1.msra.mxu0 %v390
        %412 = vmatprep.subr.mxu0 0.0
        %413 = vmatpush1.msra.mxu0 %v391
        %414 = vmatprep.subr.mxu0 0.0
        %415 = vmatpush1.msra.mxu0 %v392
        %416 = vmatprep.subr.mxu0 0.0
        %417 = vmatpush1.msra.mxu0 %v393
        %418 = vmatprep.subr.mxu0 0.0
        %419 = vmatpush1.msra.mxu0 %v394
        %420 = vmatprep.subr.mxu0 0.0
        %421 = vmatpush1.msra.mxu0 %v395
        %422 = vmatprep.subr.mxu0 0.0
        %423 = vmatpush1.msra.mxu0 %v396
        %424 = vmatprep.subr.mxu0 0.0
        %425 = vmatpush1.msra.mxu0 %v397
        %426 = vmatprep.subr.mxu0 0.0
        %427 = vmatpush1.msra.mxu0 %v398
        %428 = vmatprep.subr.mxu0 0.0
        %429 = vmatpush1.msra.mxu0 %v399
        %430 = vmatprep.subr.mxu0 0.0
        %431 = vmatpush1.msra.mxu0 %v400
        %432 = vmatprep.subr.mxu0 0.0
        %433 = vmatpush1.msra.mxu0 %v401
        %434 = vmatprep.subr.mxu0 0.0
        %435 = vmatpush1.msra.mxu0 0.0
        %436 = vmatprep.subr.mxu0 0.0
        %437 = vmatpush1.msra.mxu0 0.0
        %438 = vmatprep.subr.mxu0 0.0
        %439 = vmatpush1.msra.mxu0 0.0
        %440 = vmatprep.subr.mxu0 0.0
        %441 = vmatpush1.msra.mxu0 0.0
        %442 = vmatprep.subr.mxu0 0.0
        %443 = vmatpush1.msra.mxu0 0.0
        %444 = vmatprep.subr.mxu0 0.0
        %445 = vmatpush1.msra.mxu0 0.0
        %446 = vmatprep.subr.mxu0 0.0
        %447 = vmatpush1.msra.mxu0 0.0
        %448 = vmatprep.subr.mxu0 0.0
        %449 = vmatpush1.msra.mxu0 0.0
        %450 = vmatprep.subr.mxu0 0.0
        %451 = vmatpush1.msra.mxu0 0.0
        %452 = vmatprep.subr.mxu0 0.0
        %453 = vmatpush1.msra.mxu0 0.0
        %454 = vmatprep.subr.mxu0 0.0
        %455 = vmatpush1.msra.mxu0 0.0
        %456 = vmatprep.subr.mxu0 0.0
        %457 = vmatpush1.msra.mxu0 0.0
        %458 = vmatprep.subr.mxu0 0.0
        %459 = vmatpush1.msra.mxu0 0.0
        %460 = vmatprep.subr.mxu0 0.0
        %461 = vmatpush1.msra.mxu0 0.0
        %462 = vmatprep.subr.mxu0 0.0
        %463 = vmatpush1.msra.mxu0 0.0
        %464 = vmatprep.subr.mxu0 0.0
        %465 = vmatpush1.msra.mxu0 0.0
        %466 = vmatprep.mubr.f32.mxu0 0.0
        %467 = vmatmul.mubr.f32.gmra.mrb[0].mxu0 %v384
        %v468 = vpop.f32.mrb[0].mxu0
        %v469 = vadd.f32 0.0, %v468
        %v470 = vpop.f32.mrb[0].mxu0
        %471 = vdwg.mxu0
        %v472 = vadd.f32 %v385, %v469
        %473 = vst [vmem:[%s267] sm:$0xff] %v472
        // Predicated region
        $region45: #{feedforward.1} parent=39 // pred_check
          %p474 = pneg %p285
        $region46: #{feedforward.1} parent=39 // pred_check_branch
          %476 = sbr.rel (%p474) target = $region48
        $region47: #{feedforward.1} parent=39 // pred_region
          %v477 = vld [vmem:[%s267] sm:$0xff]
          %v478 = vld [vmem:[%s4] sm:$0x1]
          %v480 = vlaneseq
          %v481 = vshrl.u32 %v480, 7
          %v482 = vsub.s32 0, %v481
          %v483 = vrot.slane %v478, %v482
          %v485 = vadd.f32 %v477, %v483
          %486 = vst [vmem:[%s267] sm:$0xff] %v485
        $region48: #{feedforward.1} parent=39 // pred_fallthru
          _
        %s487 = sand.u32 %s164, 1
        %s488 = scalar_lea.sflag [#allocation3], %s487
        %s489 = sand.u32 %s164, 1
        %s490 = smul.addr %s489, 8
        %s491 = scalar_lea.vmem [#allocation2], %s490
        // Predicated region
        $region49: #{feedforward.1} parent=39 // pred_check
          %p492 = pneg %p174
        $region50: #{feedforward.1} parent=39 // pred_check_branch
          %494 = sbr.rel (%p492) target = $region52
        $region51: #{feedforward.1} parent=39 // pred_region
          %s496 = ssub.s32 128, 128
          %497 = vsyncadd %s488, %s496
          %s498 = smul.addr %s23, 128
          %s499 = scalar_lea.hbm %s5, %s498
          %s501 = sshll.u32 %s491, 4
          %s502 = int_to_ptr.vmem [resolvable:$true] %s501
          %504 = dma.vmem_to_hbm [thread:$0]  %s502, 128, %s499, %s488
        $region52: #{feedforward.1} parent=39 // pred_fallthru
          _
      $region40: #{feedforward.1} parent=5 // pred_fallthru
        _
      %p505 = scmp.le.s32.totalorder 2, %s14
      // Predicated region
      $region53: #{feedforward.1} parent=5 // pred_check
        %p506 = pneg %p505
      $region54: #{feedforward.1} parent=5 // pred_check_branch
        %508 = sbr.rel (%p506) target = $region56
      $region55: #{feedforward.1} parent=5 // pred_region
        %s509 = ssub.s32 %s14, 2
        // Predicated region
        $region57: #{feedforward.1} parent=55 // pred_check
          %p510 = pneg %p180
        $region58: #{feedforward.1} parent=55 // pred_check_branch
          %512 = sbr.rel (%p510) target = $region60
        $region59: #{feedforward.1} parent=55 // pred_region
          %s513 = sand.u32 %s165, 1
          %s514 = scalar_lea.sflag [#allocation3], %s513
          %s515 = sand.u32 %s165, 1
          %s516 = smul.addr %s515, 8
          %s517 = scalar_lea.vmem [#allocation2], %s516
          %518 = dma.done %s514, 128
        $region60: #{feedforward.1} parent=55 // pred_fallthru
          _
      $region56: #{feedforward.1} parent=5 // pred_fallthru
        _
    $region6: #{feedforward.1} parent=1 // loop_footer
      %s18 = sadd.s32 1, %s14
    $region7: #{feedforward.1} parent=1 // loop_footer_branch
      %13 = sbr.rel target = $region3
    $region8: #{feedforward.1} parent=1 // loop_exit
      _
    %519 = vsyncpa [#allocation3], 1
    %s520 = scalar_lea.sflag [#allocation3], 1
    %521 = vsyncpa %s520, 1

</llo_original>
